<compile_context>
chip_gen: v7x
topology: tpu7x:2x2x1
jax: 0.10.0
libtpu: 0.0.40
codegen_flags: <defaults>
</compile_context>

<pallas_src>
import math

import jax
import jax.numpy as jnp
from jax.experimental import pallas as pl
from jax.experimental.pallas import tpu as pltpu


# ----------------------------------------------------------------------------- helpers

def _round_up(n, m):
    return m * pl.cdiv(n, m)


def _gelu_tanh(x):
    # GELU with tanh approximation (matches torch.nn.GELU(approximate='tanh')).
    # Python scalars are weakly typed, so this stays in x.dtype (bf16 or f32).
    c = math.sqrt(2.0 / math.pi)
    return 0.5 * x * (1.0 + jnp.tanh(c * (x + 0.044715 * x * x * x)))


def _elementwise_dtype():
    """bf16 bias+GELU on parts with a bf16 VPU/EUP (v6e, v7x); f32 otherwise (v5e/v4)."""
    kind = jax.devices()[0].device_kind.lower()
    if "v6" in kind or "v7" in kind:
        return jnp.bfloat16
    return jnp.float32


def _vmem_limit_bytes():
    """~75% of physical VMEM: 96 MiB on 128 MiB parts (v5e/v6e), 48 MiB on v7x."""
    try:
        cap = int(pltpu.get_tpu_info().vmem_capacity_bytes)
    except Exception:  # hardware-info query unavailable: assume the smallest (v7x) part
        cap = 64 * 1024 * 1024
    limit = cap * 3 // 4
    return max(32 * 1024 * 1024, min(limit, 100 * 1024 * 1024))


def _pick_hidden_chunk(H, hc_max=1024):
    """Largest multiple of 128 that divides H and is <= hc_max (falls back to H)."""
    if H <= hc_max:
        return H
    for hc in range(hc_max, 0, -128):
        if H % hc == 0:
            return hc
    return H


# ------------------------------------------------------------- pl.Buffered(1) capability probe
# One-time, isolated feature check (tiny copy kernel) so that any failure of the REAL
# MLP kernel (e.g. a genuine VMEM OOM) is never swallowed by a fallback path.

_BUFFERED_OK = None


def _probe_copy_kernel(x_ref, o_ref):
    o_ref[...] = x_ref[...]


def _buffered_supported():
    global _BUFFERED_OK
    if _BUFFERED_OK is None:
        try:
            fn = pl.pallas_call(
                _probe_copy_kernel,
                out_shape=jax.ShapeDtypeStruct((8, 128), jnp.float32),
                grid=(1,),
                in_specs=[pl.BlockSpec((8, 128), lambda i: (0, 0),
                                       pipeline_mode=pl.Buffered(1))],
                out_specs=pl.BlockSpec((8, 128), lambda i: (0, 0)),
            )
            jax.block_until_ready(fn(jnp.zeros((8, 128), jnp.float32)))
            _BUFFERED_OK = True
        except Exception:  # isolated feature probe only; never wraps the real kernel
            _BUFFERED_OK = False
    return _BUFFERED_OK


def _resident_spec(shape):
    # Grid-invariant operand (constant index_map): one VMEM buffer is enough.
    if _buffered_supported():
        return pl.BlockSpec(shape, lambda i: (0, 0), pipeline_mode=pl.Buffered(1))
    return pl.BlockSpec(shape, lambda i: (0, 0))


# ----------------------------------------------------------------------------- kernel

def _make_mlp_kernel(n_chunks, hc, ew_dtype):
    mm_dtype = jnp.bfloat16  # MXU operand dtype; accumulation stays f32

    def mlp_kernel(x_ref, w1_ref, b1_ref, w2_ref, b2_ref, o_ref):
        # x_ref:  (tm, D)  native dtype row tile (ragged last tile allowed)
        # w1_ref: (D, H)   bf16 c_fc weight (in_features, out_features), resident
        # b1_ref: (1, H)   ew_dtype c_fc bias
        # w2_ref: (H, D)   bf16 c_proj weight, resident
        # b2_ref: (1, D)   f32 c_proj bias
        # o_ref:  (tm, D)  output tile (native dtype)
        x = x_ref[...].astype(mm_dtype)  # in-kernel activation cast (saves an HBM pass)

        acc = None
        for c in range(n_chunks):
            sl = slice(c * hc, (c + 1) * hc)
            # Matmul 1 on the MXU: bf16 operands, f32 accumulation.
            h = jnp.dot(x, w1_ref[:, sl], preferred_element_type=jnp.float32)
            # Bias + GELU in ew_dtype (bf16 on v6e/v7x, f32 on v5e).
            h = h.astype(ew_dtype) + b1_ref[:, sl]
            h = _gelu_tanh(h)
            h = h.astype(mm_dtype)
            # Matmul 2 on the MXU, accumulated in f32 across hidden chunks.
            p = jnp.dot(h, w2_ref[sl, :], preferred_element_type=jnp.float32)
            acc = p if acc is None else acc + p

        out = acc + b2_ref[...]  # f32 bias add once at the end
        o_ref[...] = out.astype(o_ref.dtype)

    return mlp_kernel


# ----------------------------------------------------------------------------- wrapper

def mlp_forward(x, w1, b1, w2, b2, *, tm_max=512, hc_max=1024):
    """x: (B, T, D).  w1: (D, 4D), b1: (4D,), w2: (4D, D), b2: (D,).

    Weights are (in_features, out_features), i.e. the transpose of PyTorch's
    nn.Linear weight.  Returns (B, T, D) in x.dtype.
    """
    B, T, D = x.shape
    H = w1.shape[1]
    assert w1.shape == (D, H) and w2.shape == (H, D)
    assert b1.shape == (H,) and b2.shape == (D,)
    M = B * T

    # ---- row tile: MXU-friendly, >=2 tiles for small M (v7x megacore), never
    # ---- larger than the sublane-rounded row count (no wrapper-side padding).
    tm = tm_max
    if M <= tm:
        tm = 256
    tm = min(tm, _round_up(M, 8))
    grid_m = pl.cdiv(M, tm)  # last tile may be ragged: OOB rows are dropped on store

    # ---- hidden-dim chunk processed per inner-loop step inside the kernel.
    hc = _pick_hidden_chunk(H, hc_max)
    n_chunks = H // hc

    ew_dtype = _elementwise_dtype()
    mm_dtype = jnp.bfloat16

    x2d = x.reshape(M, D)                       # native dtype; bf16 cast happens in-kernel
    # NOTE: in a real training loop, keep bf16 master copies of the weights so these
    # casts are not on the per-call path.
    w1c = w1.astype(mm_dtype)
    w2c = w2.astype(mm_dtype)
    b1c = b1.reshape(1, H).astype(ew_dtype)
    b2c = b2.reshape(1, D).astype(jnp.float32)

    x_itemsize = jnp.dtype(x.dtype).itemsize
    M_eff = grid_m * tm
    cost = pl.CostEstimate(
        flops=4 * M_eff * D * H,                 # two (M x D x H) matmuls
        transcendentals=M_eff * H,               # one tanh per hidden element
        bytes_accessed=(M_eff * D * x_itemsize   # x (native dtype)
                        + 2 * D * H * 2          # W1 + W2 (bf16)
                        + H * jnp.dtype(ew_dtype).itemsize + D * 4  # biases
                        + M_eff * D * x_itemsize),                  # output
    )

    call = pl.pallas_call(
        _make_mlp_kernel(n_chunks, hc, ew_dtype),
        out_shape=jax.ShapeDtypeStruct((M, D), x.dtype),
        grid_spec=pltpu.PrefetchScalarGridSpec(
            num_scalar_prefetch=0,
            grid=(grid_m,),
            in_specs=[
                pl.BlockSpec((tm, D), lambda i: (i, 0)),   # x tile (double-buffered)
                _resident_spec((D, H)),                    # W1 (resident)
                _resident_spec((1, H)),                    # b1
                _resident_spec((H, D)),                    # W2 (resident)
                _resident_spec((1, D)),                    # b2
            ],
            out_specs=pl.BlockSpec((tm, D), lambda i: (i, 0)),
        ),
        compiler_params=pltpu.CompilerParams(
            dimension_semantics=("parallel",),
            vmem_limit_bytes=_vmem_limit_bytes(),
        ),
        cost_estimate=cost,
    )

    out2d = call(x2d, w1c, b1c, w2c, b2c)
    return out2d.reshape(B, T, D)


# ----------------------------------------------------------------------------- demo

if __name__ == "__main__":
    # Small shapes consistent with the module (d_embed scaled down, 4x hidden).
    B, T, D = 2, 8, 128
    H = 4 * D

    key = jax.random.PRNGKey(0)
    kx, kw1, kb1, kw2, kb2 = jax.random.split(key, 5)

    x = jax.random.normal(kx, (B, T, D), dtype=jnp.float32)
    # Deterministic init mimicking nn.Linear's U(-1/sqrt(fan_in), 1/sqrt(fan_in)).
    w1 = jax.random.uniform(kw1, (D, H), jnp.float32, -1.0, 1.0) / math.sqrt(D)
    b1 = jax.random.uniform(kb1, (H,), jnp.float32, -1.0, 1.0) / math.sqrt(D)
    w2 = jax.random.uniform(kw2, (H, D), jnp.float32, -1.0, 1.0) / math.sqrt(H)
    b2 = jax.random.uniform(kb2, (D,), jnp.float32, -1.0, 1.0) / math.sqrt(H)

    out = mlp_forward(x, w1, b1, w2, b2)
    jax.block_until_ready(out)
    assert out.shape == (B, T, D)

    # Matched-precision reference: bf16 matmul operands, f32 MXU accumulation,
    # bias+GELU in the SAME elementwise dtype the kernel chose for this chip.
    ew_dtype = _elementwise_dtype()
    xb = x.reshape(-1, D).astype(jnp.bfloat16)
    h = jnp.dot(xb, w1.astype(jnp.bfloat16), preferred_element_type=jnp.float32)
    h = h.astype(ew_dtype) + b1.astype(ew_dtype)
    h = _gelu_tanh(h)
    ref = jnp.dot(h.astype(jnp.bfloat16), w2.astype(jnp.bfloat16),
                  preferred_element_type=jnp.float32) + b2
    ref = ref.reshape(B, T, D).astype(out.dtype)

    err = float(jnp.max(jnp.abs(out - ref)))
    assert jnp.allclose(out, ref, atol=2e-2, rtol=2e-2), err

    print("KERNEL_OK")
</pallas_src>

<mosaic_0001>
module attributes {stable_mosaic.version = 11 : i64} {
  func.func @_probe_copy_kernel(%arg0: i32, %arg1: memref<8x128xf32, #tpu.memory_space<vmem>>, %arg2: memref<8x128xf32, #tpu.memory_space<vmem>>) attributes {dimension_semantics = [#tpu.dimension_semantics<arbitrary>], iteration_bounds = array<i64: 1>, scalar_prefetch = 0 : i64, scratch_operands = 0 : i64, tpu.core_type = #tpu.core_type<tc>, window_params = [{pipeline_mode = #tpu.pipeline_mode<synchronous>, transform_indices = @transform_0, window_bounds = array<i64: 8, 128>}, {pipeline_mode = #tpu.pipeline_mode<synchronous>, transform_indices = @transform_1, window_bounds = array<i64: 8, 128>}]} {
    %c0 = arith.constant 0 : index
    %c0_0 = arith.constant 0 : index
    %0 = vector.load %arg1[%c0, %c0_0] : memref<8x128xf32, #tpu.memory_space<vmem>>, vector<8x128xf32>
    %c0_1 = arith.constant 0 : index
    %c0_2 = arith.constant 0 : index
    %1 = vector.load %arg2[%c0_1, %c0_2] : memref<8x128xf32, #tpu.memory_space<vmem>>, vector<8x128xf32>
    tpu.vector_store %arg2[%c0_1, %c0_2], %0 {strides = array<i32>} : memref<8x128xf32, #tpu.memory_space<vmem>>, vector<8x128xf32>,
    return
  }
  func.func @transform_0(%arg0: i32) -> (i32, i32) {
    %c0_i32 = arith.constant 0 : i32
    %c0_i32_0 = arith.constant 0 : i32
    %c0_i32_1 = arith.constant 0 : i32
    return %c0_i32, %c0_i32_0 : i32, i32
  }
  func.func @transform_1(%arg0: i32) -> (i32, i32) {
    %c0_i32 = arith.constant 0 : i32
    %c0_i32_0 = arith.constant 0 : i32
    %c0_i32_1 = arith.constant 0 : i32
    return %c0_i32, %c0_i32_0 : i32, i32
  }
}

module attributes {stable_mosaic.version = 11 : i64} {
  func.func @mlp_kernel(%arg0: i32, %arg1: memref<16x128xf32, #tpu.memory_space<vmem>>, %arg2: memref<128x512xbf16, #tpu.memory_space<vmem>>, %arg3: memref<1x512xf32, #tpu.memory_space<vmem>>, %arg4: memref<512x128xbf16, #tpu.memory_space<vmem>>, %arg5: memref<1x128xf32, #tpu.memory_space<vmem>>, %arg6: memref<16x128xf32, #tpu.memory_space<vmem>>) attributes {dimension_semantics = [#tpu.dimension_semantics<parallel>], iteration_bounds = array<i64: 1>, scalar_prefetch = 0 : i64, scratch_operands = 0 : i64, tpu.core_type = #tpu.core_type<tc>, window_params = [{transform_indices = @transform_0, window_bounds = array<i64: 16, 128>}, {pipeline_mode = #tpu.pipeline_mode<synchronous>, transform_indices = @transform_1, window_bounds = array<i64: 128, 512>}, {pipeline_mode = #tpu.pipeline_mode<synchronous>, transform_indices = @transform_2, window_bounds = array<i64: 1, 512>}, {pipeline_mode = #tpu.pipeline_mode<synchronous>, transform_indices = @transform_3, window_bounds = array<i64: 512, 128>}, {pipeline_mode = #tpu.pipeline_mode<synchronous>, transform_indices = @transform_4, window_bounds = array<i64: 1, 128>}, {transform_indices = @transform_5, window_bounds = array<i64: 16, 128>}]} {
    %c0 = arith.constant 0 : index
    %c0_0 = arith.constant 0 : index
    %0 = vector.load %arg1[%c0, %c0_0] : memref<16x128xf32, #tpu.memory_space<vmem>>, vector<16x128xf32>
    %1 = arith.truncf %0 : vector<16x128xf32> to vector<16x128xbf16>
    %c0_1 = arith.constant 0 : index
    %c0_2 = arith.constant 0 : index
    %2 = vector.load %arg2[%c0_1, %c0_2] : memref<128x512xbf16, #tpu.memory_space<vmem>>, vector<128x512xbf16>
    %cst = arith.constant dense<0.000000e+00> : vector<16x512xf32>
    %3 = tpu.matmul %1, %2, %cst {dimension_numbers = #tpu.dot_dimension_numbers<[1], [0], [0], [1], [0, 0, 1, 1], [], []>} : vector<16x128xbf16>, vector<128x512xbf16>, vector<16x512xf32> -> vector<16x512xf32>
    %c0_3 = arith.constant 0 : index
    %c0_4 = arith.constant 0 : index
    %4 = vector.load %arg3[%c0_3, %c0_4] : memref<1x512xf32, #tpu.memory_space<vmem>>, vector<1x512xf32>
    %5 = vector.broadcast %4 : vector<1x512xf32> to vector<16x512xf32>
    %6 = arith.addf %3, %5 : vector<16x512xf32>
    %cst_5 = arith.constant 5.000000e-01 : f32
    %7 = vector.broadcast %cst_5 : f32 to vector<16x512xf32>
    %8 = arith.mulf %7, %6 : vector<16x512xf32>
    %cst_6 = arith.constant 4.471500e-02 : f32
    %9 = vector.broadcast %cst_6 : f32 to vector<16x512xf32>
    %10 = arith.mulf %9, %6 : vector<16x512xf32>
    %11 = arith.mulf %10, %6 : vector<16x512xf32>
    %12 = arith.mulf %11, %6 : vector<16x512xf32>
    %13 = arith.addf %6, %12 : vector<16x512xf32>
    %cst_7 = arith.constant 0.797884583 : f32
    %14 = vector.broadcast %cst_7 : f32 to vector<16x512xf32>
    %15 = arith.mulf %14, %13 : vector<16x512xf32>
    %16 = math.tanh %15 : vector<16x512xf32>
    %cst_8 = arith.constant 1.000000e+00 : f32
    %17 = vector.broadcast %cst_8 : f32 to vector<16x512xf32>
    %18 = arith.addf %17, %16 : vector<16x512xf32>
    %19 = arith.mulf %8, %18 : vector<16x512xf32>
    %20 = arith.truncf %19 : vector<16x512xf32> to vector<16x512xbf16>
    %c0_9 = arith.constant 0 : index
    %c0_10 = arith.constant 0 : index
    %21 = vector.load %arg4[%c0_9, %c0_10] : memref<512x128xbf16, #tpu.memory_space<vmem>>, vector<512x128xbf16>
    %cst_11 = arith.constant dense<0.000000e+00> : vector<16x128xf32>
    %22 = tpu.matmul %20, %21, %cst_11 {dimension_numbers = #tpu.dot_dimension_numbers<[1], [0], [0], [1], [0, 0, 1, 1], [], []>} : vector<16x512xbf16>, vector<512x128xbf16>, vector<16x128xf32> -> vector<16x128xf32>
    %c0_12 = arith.constant 0 : index
    %c0_13 = arith.constant 0 : index
    %23 = vector.load %arg5[%c0_12, %c0_13] : memref<1x128xf32, #tpu.memory_space<vmem>>, vector<1x128xf32>
    %24 = vector.broadcast %23 : vector<1x128xf32> to vector<16x128xf32>
    %25 = arith.addf %22, %24 : vector<16x128xf32>
    %c0_14 = arith.constant 0 : index
    %c0_15 = arith.constant 0 : index
    %26 = vector.load %arg6[%c0_14, %c0_15] : memref<16x128xf32, #tpu.memory_space<vmem>>, vector<16x128xf32>
    tpu.vector_store %arg6[%c0_14, %c0_15], %25 {strides = array<i32>} : memref<16x128xf32, #tpu.memory_space<vmem>>, vector<16x128xf32>,
    return
  }
  func.func @transform_0(%arg0: i32) -> (i32, i32) {
    %c0_i32 = arith.constant 0 : i32
    %c0_i32_0 = arith.constant 0 : i32
    return %arg0, %c0_i32 : i32, i32
  }
  func.func @transform_1(%arg0: i32) -> (i32, i32) {
    %c0_i32 = arith.constant 0 : i32
    %c0_i32_0 = arith.constant 0 : i32
    %c0_i32_1 = arith.constant 0 : i32
    return %c0_i32, %c0_i32_0 : i32, i32
  }
  func.func @transform_2(%arg0: i32) -> (i32, i32) {
    %c0_i32 = arith.constant 0 : i32
    %c0_i32_0 = arith.constant 0 : i32
    %c0_i32_1 = arith.constant 0 : i32
    return %c0_i32, %c0_i32_0 : i32, i32
  }
  func.func @transform_3(%arg0: i32) -> (i32, i32) {
    %c0_i32 = arith.constant 0 : i32
    %c0_i32_0 = arith.constant 0 : i32
    %c0_i32_1 = arith.constant 0 : i32
    return %c0_i32, %c0_i32_0 : i32, i32
  }
  func.func @transform_4(%arg0: i32) -> (i32, i32) {
    %c0_i32 = arith.constant 0 : i32
    %c0_i32_0 = arith.constant 0 : i32
    %c0_i32_1 = arith.constant 0 : i32
    return %c0_i32, %c0_i32_0 : i32, i32
  }
  func.func @transform_5(%arg0: i32) -> (i32, i32) {
    %c0_i32 = arith.constant 0 : i32
    %c0_i32_0 = arith.constant 0 : i32
    return %arg0, %c0_i32 : i32, i32
  }
}

</mosaic_0001>

<llo_original>
// kernel: tpu_custom_call.1
$region0: #{tpu_custom_call.1}
  #allocation0 [shape = 'u32[]', space=smem, size = 0x4, offset = 0x4, fixed_abs, tag = 'smem constant byte address 0x4 - core index']
  #allocation1 [shape = 'u32[144,128]{1,0:T(1,128)}', space=vmem, size = 0x12000, scoped, tag = 'internal scratch']
  %s0 = inlined_call_operand.hbm [shape: f32[8,128], index: 0, kind: input, shape index: {}]
  %s1 = inlined_call_operand.hbm [shape: f32[8,128], index: 1, kind: output, shape index: {}]
  %s2 = sld [smem:[#allocation0]]
  $region18: #{tpu_custom_call.1} parent=0
    _
  %s4 = ssub.s32 1, %s2
  %s5 = scalar_select 0, %s4, %s2
  $region1: #{tpu_custom_call.1} parent=0
    #allocation2 [shape = 'u8[4096]{0}', space=vmem, size = 0x1000, scoped, tag = 'input window, operand 0, single buffered']
    #allocation3 [shape = 's32[1]{0}', space=sflag, size = 0x4, scoped, tag = 'scoped memory for tpu_custom_call.1']
    #allocation4 [shape = 's32[1]{0}', space=sflag, size = 0x4, scoped, tag = 'scoped memory for tpu_custom_call.1']
    #allocation5 [shape = 'u8[4096]{0}', space=vmem, size = 0x1000, scoped, tag = 'output window, operand 0, single buffered']
    %6 = vsyncpa [#allocation3], 0
    %7 = vsyncpa [#allocation4], 0
    // Predicated region
    $region2: #{tpu_custom_call.1} parent=1 // pred_check
      _
    $region3: #{tpu_custom_call.1} parent=1 // pred_check_branch
      %9 = sbr.rel (0) target = $region5
    $region4: #{tpu_custom_call.1} parent=1 // pred_region
      %s11 = ssub.s32 128, 128
      %12 = vsyncadd [#allocation3], %s11
      %s14 = sshll.u32 [#allocation2], 4
      %s15 = int_to_ptr.vmem [resolvable:$true] %s14
      %17 = dma.hbm_to_vmem [thread:$0]  %s0, 128, %s15, [#allocation3]
    $region5: #{tpu_custom_call.1} parent=1 // pred_fallthru
      _
    // Predicated region
    $region6: #{tpu_custom_call.1} parent=1 // pred_check
      _
    $region7: #{tpu_custom_call.1} parent=1 // pred_check_branch
      %19 = sbr.rel (0) target = $region9
    $region8: #{tpu_custom_call.1} parent=1 // pred_region
      %20 = dma.done [#allocation3], 128
    $region9: #{tpu_custom_call.1} parent=1 // pred_fallthru
      _
    %v21 = vld [vmem:[#allocation2] sm:$0xff]
    %22 = vst [vmem:[#allocation5] sm:$0xff] %v21
    // Predicated region
    $region10: #{tpu_custom_call.1} parent=1 // pred_check
      _
    $region11: #{tpu_custom_call.1} parent=1 // pred_check_branch
      %24 = sbr.rel (0) target = $region13
    $region12: #{tpu_custom_call.1} parent=1 // pred_region
      %s26 = ssub.s32 128, 128
      %27 = vsyncadd [#allocation4], %s26
      %s29 = sshll.u32 [#allocation5], 4
      %s30 = int_to_ptr.vmem [resolvable:$true] %s29
      %32 = dma.vmem_to_hbm [thread:$0]  %s30, 128, %s1, [#allocation4]
    $region13: #{tpu_custom_call.1} parent=1 // pred_fallthru
      _
    // Predicated region
    $region14: #{tpu_custom_call.1} parent=1 // pred_check
      _
    $region15: #{tpu_custom_call.1} parent=1 // pred_check_branch
      %34 = sbr.rel (0) target = $region17
    $region16: #{tpu_custom_call.1} parent=1 // pred_region
      %35 = dma.done [#allocation4], 128
    $region17: #{tpu_custom_call.1} parent=1 // pred_fallthru
      _
    %36 = vsyncpa [#allocation3], 1
    %37 = vsyncpa [#allocation4], 1

// kernel: tpu_custom_call.1
$region0: #{tpu_custom_call.1}
  #allocation0 [shape = 'u32[]', space=smem, size = 0x4, offset = 0x4, fixed_abs, tag = 'smem constant byte address 0x4 - core index']
  #allocation1 [shape = 'u32[144,128]{1,0:T(1,128)}', space=vmem, size = 0x12000, scoped, tag = 'internal scratch']
  %s0 = inlined_call_operand.hbm [shape: f32[16,128], index: 0, kind: input, shape index: {}]
  %s1 = inlined_call_operand.hbm [shape: bf16[128,512], index: 1, kind: input, shape index: {}]
  %s2 = inlined_call_operand.vmem [shape: f32[1,512], index: 2, kind: input, shape index: {}]
  %s3 = inlined_call_operand.hbm [shape: bf16[512,128], index: 3, kind: input, shape index: {}]
  %s4 = inlined_call_operand.vmem [shape: f32[1,128], index: 4, kind: input, shape index: {}]
  %s5 = inlined_call_operand.hbm [shape: f32[16,128], index: 5, kind: output, shape index: {}]
  %s6 = sld [smem:[#allocation0]]
  $region42: #{tpu_custom_call.1} parent=0
    _
  %s8 = ssub.s32 1, %s6
  %s9 = scalar_select 0, %s8, %s6
  $region1: #{tpu_custom_call.1} parent=0
    #allocation2 [shape = 'u8[8192]{0}', space=vmem, size = 0x2000, scoped, tag = 'input window, operand 0, single buffered']
    #allocation3 [shape = 's32[1]{0}', space=sflag, size = 0x4, scoped, tag = 'scoped memory for tpu_custom_call.1']
    #allocation4 [shape = 's32[1]{0}', space=sflag, size = 0x4, scoped, tag = 'scoped memory for tpu_custom_call.1']
    #allocation5 [shape = 'u8[131072]{0}', space=vmem, size = 0x20000, scoped, tag = 'input window, operand 1, single buffered']
    #allocation6 [shape = 's32[1]{0}', space=sflag, size = 0x4, scoped, tag = 'scoped memory for tpu_custom_call.1']
    #allocation7 [shape = 'u8[131072]{0}', space=vmem, size = 0x20000, scoped, tag = 'input window, operand 3, single buffered']
    #allocation8 [shape = 'u8[8192]{0}', space=vmem, size = 0x2000, scoped, tag = 'output window, operand 0, single buffered']
    %10 = vsyncpa [#allocation3], 0
    %11 = vsyncpa [#allocation6], 0
    %12 = vsyncpa [#allocation4], 0
    // Predicated region
    $region2: #{tpu_custom_call.1} parent=1 // pred_check
      _
    $region3: #{tpu_custom_call.1} parent=1 // pred_check_branch
      %14 = sbr.rel (0) target = $region5
    $region4: #{tpu_custom_call.1} parent=1 // pred_region
      %s16 = ssub.s32 256, 256
      %17 = vsyncadd [#allocation3], %s16
      %s18 = sshll.u32 [#allocation2], 4
      %s19 = int_to_ptr.vmem [resolvable:$true] %s18
      %24 = dma.hbm_to_vmem [thread:$0]  %s0, 256, %s19, [#allocation3], 128, 128, 8
    $region5: #{tpu_custom_call.1} parent=1 // pred_fallthru
      _
    // Predicated region
    $region6: #{tpu_custom_call.1} parent=1 // pred_check
      _
    $region7: #{tpu_custom_call.1} parent=1 // pred_check_branch
      %26 = sbr.rel (0) target = $region9
    $region8: #{tpu_custom_call.1} parent=1 // pred_region
      %s28 = ssub.s32 4096, 4096
      %29 = vsyncadd [#allocation6], %s28
      %s30 = sshll.u32 [#allocation5], 4
      %s31 = int_to_ptr.vmem [resolvable:$true] %s30
      %36 = dma.hbm_to_vmem [thread:$0]  %s1, 4096, %s31, [#allocation6], 256, 256, 16
    $region9: #{tpu_custom_call.1} parent=1 // pred_fallthru
      _
    // Predicated region
    $region10: #{tpu_custom_call.1} parent=1 // pred_check
      _
    $region11: #{tpu_custom_call.1} parent=1 // pred_check_branch
      %38 = sbr.rel (0) target = $region13
    $region12: #{tpu_custom_call.1} parent=1 // pred_region
      _
    $region13: #{tpu_custom_call.1} parent=1 // pred_fallthru
      _
    // Predicated region
    $region14: #{tpu_custom_call.1} parent=1 // pred_check
      _
    $region15: #{tpu_custom_call.1} parent=1 // pred_check_branch
      %40 = sbr.rel (0) target = $region17
    $region16: #{tpu_custom_call.1} parent=1 // pred_region
      %s42 = ssub.s32 4096, 4096
      %43 = vsyncadd [#allocation6], %s42
      %s44 = sshll.u32 [#allocation7], 4
      %s45 = int_to_ptr.vmem [resolvable:$true] %s44
      %50 = dma.hbm_to_vmem [thread:$0]  %s3, 4096, %s45, [#allocation6], 64, 64, 4
    $region17: #{tpu_custom_call.1} parent=1 // pred_fallthru
      _
    // Predicated region
    $region18: #{tpu_custom_call.1} parent=1 // pred_check
      _
    $region19: #{tpu_custom_call.1} parent=1 // pred_check_branch
      %52 = sbr.rel (0) target = $region21
    $region20: #{tpu_custom_call.1} parent=1 // pred_region
      _
    $region21: #{tpu_custom_call.1} parent=1 // pred_fallthru
      _
    // Predicated region
    $region22: #{tpu_custom_call.1} parent=1 // pred_check
      _
    $region23: #{tpu_custom_call.1} parent=1 // pred_check_branch
      %54 = sbr.rel (0) target = $region25
    $region24: #{tpu_custom_call.1} parent=1 // pred_region
      %55 = dma.done [#allocation3], 256
    $region25: #{tpu_custom_call.1} parent=1 // pred_fallthru
      _
    // Predicated region
    $region26: #{tpu_custom_call.1} parent=1 // pred_check
      _
    $region27: #{tpu_custom_call.1} parent=1 // pred_check_branch
      %57 = sbr.rel (0) target = $region29
    $region28: #{tpu_custom_call.1} parent=1 // pred_region
      %58 = dma.done [#allocation6], 4096
    $region29: #{tpu_custom_call.1} parent=1 // pred_fallthru
      _
    // Predicated region
    $region30: #{tpu_custom_call.1} parent=1 // pred_check
      _
    $region31: #{tpu_custom_call.1} parent=1 // pred_check_branch
      %60 = sbr.rel (0) target = $region33
    $region32: #{tpu_custom_call.1} parent=1 // pred_region
      %61 = dma.done [#allocation6], 4096
    $region33: #{tpu_custom_call.1} parent=1 // pred_fallthru
      _
    %v63 = vld [vmem:[#allocation2] sm:$0xff]
    %v64 = vld [vmem:[#allocation2 + $0x8] sm:$0xff]
    %v65 = vpack.c.bf16 %v64, %v63
    %v66 = vld [vmem:[#allocation5] sm:$0xff]
    %v67 = vld [vmem:[#allocation5 + $0x8] sm:$0xff]
    %v68 = vld [vmem:[#allocation5 + $0x10] sm:$0xff]
    %v69 = vld [vmem:[#allocation5 + $0x18] sm:$0xff]
    %v70 = vld [vmem:[#allocation5 + $0x20] sm:$0xff]
    %v71 = vld [vmem:[#allocation5 + $0x28] sm:$0xff]
    %v72 = vld [vmem:[#allocation5 + $0x30] sm:$0xff]
    %v73 = vld [vmem:[#allocation5 + $0x38] sm:$0xff]
    %v74 = vld [vmem:[#allocation5 + $0x40] sm:$0xff]
    %v75 = vld [vmem:[#allocation5 + $0x48] sm:$0xff]
    %v76 = vld [vmem:[#allocation5 + $0x50] sm:$0xff]
    %v77 = vld [vmem:[#allocation5 + $0x58] sm:$0xff]
    %v78 = vld [vmem:[#allocation5 + $0x60] sm:$0xff]
    %v79 = vld [vmem:[#allocation5 + $0x68] sm:$0xff]
    %v80 = vld [vmem:[#allocation5 + $0x70] sm:$0xff]
    %v81 = vld [vmem:[#allocation5 + $0x78] sm:$0xff]
    %v82 = vld [vmem:[#allocation5 + $0x80] sm:$0xff]
    %v83 = vld [vmem:[#allocation5 + $0x88] sm:$0xff]
    %v84 = vld [vmem:[#allocation5 + $0x90] sm:$0xff]
    %v85 = vld [vmem:[#allocation5 + $0x98] sm:$0xff]
    %v86 = vld [vmem:[#allocation5 + $0xa0] sm:$0xff]
    %v87 = vld [vmem:[#allocation5 + $0xa8] sm:$0xff]
    %v88 = vld [vmem:[#allocation5 + $0xb0] sm:$0xff]
    %v89 = vld [vmem:[#allocation5 + $0xb8] sm:$0xff]
    %v90 = vld [vmem:[#allocation5 + $0xc0] sm:$0xff]
    %v91 = vld [vmem:[#allocation5 + $0xc8] sm:$0xff]
    %v92 = vld [vmem:[#allocation5 + $0xd0] sm:$0xff]
    %v93 = vld [vmem:[#allocation5 + $0xd8] sm:$0xff]
    %v94 = vld [vmem:[#allocation5 + $0xe0] sm:$0xff]
    %v95 = vld [vmem:[#allocation5 + $0xe8] sm:$0xff]
    %v96 = vld [vmem:[#allocation5 + $0xf0] sm:$0xff]
    %v97 = vld [vmem:[#allocation5 + $0xf8] sm:$0xff]
    %v98 = vld [vmem:[%s2] sm:$0xf]
    %v100 = vlaneseq
    %v101 = vshrl.u32 %v100, 7
    %v102 = vsub.s32 0, %v101
    %v103 = vrot.slane %v98, %v102
    %v104 = vlaneseq
    %v105 = vshrl.u32 %v104, 7
    %v106 = vsub.s32 1, %v105
    %v107 = vrot.slane %v98, %v106
    %v108 = vlaneseq
    %v109 = vshrl.u32 %v108, 7
    %v110 = vsub.s32 2, %v109
    %v111 = vrot.slane %v98, %v110
    %v112 = vlaneseq
    %v113 = vshrl.u32 %v112, 7
    %v114 = vsub.s32 3, %v113
    %v115 = vrot.slane %v98, %v114
    %v152 = vunpack.c.l.b16 %v66
    %v153 = vunpack.c.h.b16 %v66
    %v154 = vunpack.c.l.b16 %v67
    %v155 = vunpack.c.h.b16 %v67
    %v156 = vunpack.c.l.b16 %v68
    %v157 = vunpack.c.h.b16 %v68
    %v158 = vunpack.c.l.b16 %v69
    %v159 = vunpack.c.h.b16 %v69
    %v160 = vunpack.c.l.b16 %v70
    %v161 = vunpack.c.h.b16 %v70
    %v162 = vunpack.c.l.b16 %v71
    %v163 = vunpack.c.h.b16 %v71
    %v164 = vunpack.c.l.b16 %v72
    %v165 = vunpack.c.h.b16 %v72
    %v166 = vunpack.c.l.b16 %v73
    %v167 = vunpack.c.h.b16 %v73
    %v168 = vunpack.c.l.b16 %v74
    %v169 = vunpack.c.h.b16 %v74
    %v170 = vunpack.c.l.b16 %v75
    %v171 = vunpack.c.h.b16 %v75
    %v172 = vunpack.c.l.b16 %v76
    %v173 = vunpack.c.h.b16 %v76
    %v174 = vunpack.c.l.b16 %v77
    %v175 = vunpack.c.h.b16 %v77
    %v176 = vunpack.c.l.b16 %v78
    %v177 = vunpack.c.h.b16 %v78
    %v178 = vunpack.c.l.b16 %v79
    %v179 = vunpack.c.h.b16 %v79
    %v180 = vunpack.c.l.b16 %v80
    %v181 = vunpack.c.h.b16 %v80
    %v182 = vunpack.c.l.b16 %v81
    %v183 = vunpack.c.h.b16 %v81
    %v184 = vunpack.c.l.b16 %v82
    %v185 = vunpack.c.h.b16 %v82
    %v186 = vunpack.c.l.b16 %v83
    %v187 = vunpack.c.h.b16 %v83
    %v188 = vunpack.c.l.b16 %v84
    %v189 = vunpack.c.h.b16 %v84
    %v190 = vunpack.c.l.b16 %v85
    %v191 = vunpack.c.h.b16 %v85
    %v192 = vunpack.c.l.b16 %v86
    %v193 = vunpack.c.h.b16 %v86
    %v194 = vunpack.c.l.b16 %v87
    %v195 = vunpack.c.h.b16 %v87
    %v196 = vunpack.c.l.b16 %v88
    %v197 = vunpack.c.h.b16 %v88
    %v198 = vunpack.c.l.b16 %v89
    %v199 = vunpack.c.h.b16 %v89
    %v200 = vunpack.c.l.b16 %v90
    %v201 = vunpack.c.h.b16 %v90
    %v202 = vunpack.c.l.b16 %v91
    %v203 = vunpack.c.h.b16 %v91
    %v204 = vunpack.c.l.b16 %v92
    %v205 = vunpack.c.h.b16 %v92
    %v206 = vunpack.c.l.b16 %v93
    %v207 = vunpack.c.h.b16 %v93
    %v208 = vunpack.c.l.b16 %v94
    %v209 = vunpack.c.h.b16 %v94
    %v210 = vunpack.c.l.b16 %v95
    %v211 = vunpack.c.h.b16 %v95
    %v212 = vunpack.c.l.b16 %v96
    %v213 = vunpack.c.h.b16 %v96
    %v214 = vunpack.c.l.b16 %v97
    %v215 = vunpack.c.h.b16 %v97
    %v216 = vpack.c.b16 %v156, %v152
    %v217 = vpack.c.b16 %v157, %v153
    %v218 = vpack.c.b16 %v158, %v154
    %v219 = vpack.c.b16 %v159, %v155
    %v220 = vpack.c.b16 %v164, %v160
    %v221 = vpack.c.b16 %v165, %v161
    %v222 = vpack.c.b16 %v166, %v162
    %v223 = vpack.c.b16 %v167, %v163
    %v224 = vpack.c.b16 %v172, %v168
    %v225 = vpack.c.b16 %v173, %v169
    %v226 = vpack.c.b16 %v174, %v170
    %v227 = vpack.c.b16 %v175, %v171
    %v228 = vpack.c.b16 %v180, %v176
    %v229 = vpack.c.b16 %v181, %v177
    %v230 = vpack.c.b16 %v182, %v178
    %v231 = vpack.c.b16 %v183, %v179
    %v232 = vpack.c.b16 %v188, %v184
    %v233 = vpack.c.b16 %v189, %v185
    %v234 = vpack.c.b16 %v190, %v186
    %v235 = vpack.c.b16 %v191, %v187
    %v236 = vpack.c.b16 %v196, %v192
    %v237 = vpack.c.b16 %v197, %v193
    %v238 = vpack.c.b16 %v198, %v194
    %v239 = vpack.c.b16 %v199, %v195
    %v240 = vpack.c.b16 %v204, %v200
    %v241 = vpack.c.b16 %v205, %v201
    %v242 = vpack.c.b16 %v206, %v202
    %v243 = vpack.c.b16 %v207, %v203
    %v244 = vpack.c.b16 %v212, %v208
    %v245 = vpack.c.b16 %v213, %v209
    %v246 = vpack.c.b16 %v214, %v210
    %v247 = vpack.c.b16 %v215, %v211
    %280 = vmatprep.subr.bf16.mxu0 %v217
    %281 = vmatpush1.bf16.msra.mxu0 %v216
    %282 = vmatprep.subr.bf16.mxu0 %v221
    %283 = vmatpush1.bf16.msra.mxu0 %v220
    %284 = vmatprep.subr.bf16.mxu0 %v225
    %285 = vmatpush1.bf16.msra.mxu0 %v224
    %286 = vmatprep.subr.bf16.mxu0 %v229
    %287 = vmatpush1.bf16.msra.mxu0 %v228
    %288 = vmatprep.subr.bf16.mxu0 %v233
    %289 = vmatpush1.bf16.msra.mxu0 %v232
    %290 = vmatprep.subr.bf16.mxu0 %v237
    %291 = vmatpush1.bf16.msra.mxu0 %v236
    %292 = vmatprep.subr.bf16.mxu0 %v241
    %293 = vmatpush1.bf16.msra.mxu0 %v240
    %294 = vmatprep.subr.bf16.mxu0 %v245
    %295 = vmatpush1.bf16.msra.mxu0 %v244
    %296 = vmatprep.subr.bf16.mxu0 0
    %297 = vmatpush1.bf16.msra.mxu0 0
    %298 = vmatprep.subr.bf16.mxu0 0
    %299 = vmatpush1.bf16.msra.mxu0 0
    %300 = vmatprep.subr.bf16.mxu0 0
    %301 = vmatpush1.bf16.msra.mxu0 0
    %302 = vmatprep.subr.bf16.mxu0 0
    %303 = vmatpush1.bf16.msra.mxu0 0
    %304 = vmatprep.subr.bf16.mxu0 0
    %305 = vmatpush1.bf16.msra.mxu0 0
    %306 = vmatprep.subr.bf16.mxu0 0
    %307 = vmatpush1.bf16.msra.mxu0 0
    %308 = vmatprep.subr.bf16.mxu0 0
    %309 = vmatpush1.bf16.msra.mxu0 0
    %310 = vmatprep.subr.bf16.mxu0 0
    %311 = vmatpush1.bf16.msra.mxu0 0
    %312 = vmatprep.mubr.bf16.mxu0 0
    %313 = vmatmul.mubr.bf16.gmra.mrb[0].mxu0 %v65
    %v314 = vpop.f32.mrb[0].mxu0
    %v315 = vadd.f32 %v103, %v314
    %v316 = vpop.f32.mrb[0].mxu0
    %v317 = vadd.f32 %v107, %v316
    %v318 = vpop.f32.mrb[0].mxu0
    %v319 = vadd.f32 %v103, %v318
    %v320 = vpop.f32.mrb[0].mxu0
    %v321 = vadd.f32 %v107, %v320
    %322 = vdwg.mxu0
    %323 = vmatprep.subr.bf16.mxu0 %v219
    %324 = vmatpush1.bf16.msra.mxu0 %v218
    %325 = vmatprep.subr.bf16.mxu0 %v223
    %326 = vmatpush1.bf16.msra.mxu0 %v222
    %327 = vmatprep.subr.bf16.mxu0 %v227
    %328 = vmatpush1.bf16.msra.mxu0 %v226
    %329 = vmatprep.subr.bf16.mxu0 %v231
    %330 = vmatpush1.bf16.msra.mxu0 %v230
    %331 = vmatprep.subr.bf16.mxu0 %v235
    %332 = vmatpush1.bf16.msra.mxu0 %v234
    %333 = vmatprep.subr.bf16.mxu0 %v239
    %334 = vmatpush1.bf16.msra.mxu0 %v238
    %335 = vmatprep.subr.bf16.mxu0 %v243
    %336 = vmatpush1.bf16.msra.mxu0 %v242
    %337 = vmatprep.subr.bf16.mxu0 %v247
    %338 = vmatpush1.bf16.msra.mxu0 %v246
    %339 = vmatprep.subr.bf16.mxu0 0
    %340 = vmatpush1.bf16.msra.mxu0 0
    %341 = vmatprep.subr.bf16.mxu0 0
    %342 = vmatpush1.bf16.msra.mxu0 0
    %343 = vmatprep.subr.bf16.mxu0 0
    %344 = vmatpush1.bf16.msra.mxu0 0
    %345 = vmatprep.subr.bf16.mxu0 0
    %346 = vmatpush1.bf16.msra.mxu0 0
    %347 = vmatprep.subr.bf16.mxu0 0
    %348 = vmatpush1.bf16.msra.mxu0 0
    %349 = vmatprep.subr.bf16.mxu0 0
    %350 = vmatpush1.bf16.msra.mxu0 0
    %351 = vmatprep.subr.bf16.mxu0 0
    %352 = vmatpush1.bf16.msra.mxu0 0
    %353 = vmatprep.subr.bf16.mxu0 0
    %354 = vmatpush1.bf16.msra.mxu0 0
    %355 = vmatprep.mubr.bf16.mxu0 0
    %356 = vmatmul.mubr.bf16.gmra.mrb[0].mxu0 %v65
    %v357 = vpop.f32.mrb[0].mxu0
    %v358 = vadd.f32 %v111, %v357
    %v359 = vpop.f32.mrb[0].mxu0
    %v360 = vadd.f32 %v115, %v359
    %v361 = vpop.f32.mrb[0].mxu0
    %v362 = vadd.f32 %v111, %v361
    %v363 = vpop.f32.mrb[0].mxu0
    %v364 = vadd.f32 %v115, %v363
    %365 = vdwg.mxu0
    %v366 = vmul.f32 %v315, 0.5
    %v367 = vmul.f32 %v317, 0.5
    %v368 = vmul.f32 %v358, 0.5
    %v369 = vmul.f32 %v360, 0.5
    %v370 = vmul.f32 %v319, 0.5
    %v371 = vmul.f32 %v321, 0.5
    %v372 = vmul.f32 %v362, 0.5
    %v373 = vmul.f32 %v364, 0.5
    %v374 = vmul.f32 %v315, 0.044715
    %v375 = vmul.f32 %v317, 0.044715
    %v376 = vmul.f32 %v358, 0.044715
    %v377 = vmul.f32 %v360, 0.044715
    %v378 = vmul.f32 %v319, 0.044715
    %v379 = vmul.f32 %v321, 0.044715
    %v380 = vmul.f32 %v362, 0.044715
    %v381 = vmul.f32 %v364, 0.044715
    %v382 = vmul.f32 %v374, %v315
    %v383 = vmul.f32 %v375, %v317
    %v384 = vmul.f32 %v376, %v358
    %v385 = vmul.f32 %v377, %v360
    %v386 = vmul.f32 %v378, %v319
    %v387 = vmul.f32 %v379, %v321
    %v388 = vmul.f32 %v380, %v362
    %v389 = vmul.f32 %v381, %v364
    %v390 = vmul.f32 %v382, %v315
    %v391 = vmul.f32 %v383, %v317
    %v392 = vmul.f32 %v384, %v358
    %v393 = vmul.f32 %v385, %v360
    %v394 = vmul.f32 %v386, %v319
    %v395 = vmul.f32 %v387, %v321
    %v396 = vmul.f32 %v388, %v362
    %v397 = vmul.f32 %v389, %v364
    %v398 = vadd.f32 %v315, %v390
    %v399 = vadd.f32 %v317, %v391
    %v400 = vadd.f32 %v358, %v392
    %v401 = vadd.f32 %v360, %v393
    %v402 = vadd.f32 %v319, %v394
    %v403 = vadd.f32 %v321, %v395
    %v404 = vadd.f32 %v362, %v396
    %v405 = vadd.f32 %v364, %v397
    %v406 = vmul.f32 %v398, 0.7978846
    %v407 = vmul.f32 %v399, 0.7978846
    %v408 = vmul.f32 %v400, 0.7978846
    %v409 = vmul.f32 %v401, 0.7978846
    %v410 = vmul.f32 %v402, 0.7978846
    %v411 = vmul.f32 %v403, 0.7978846
    %v412 = vmul.f32 %v404, 0.7978846
    %v413 = vmul.f32 %v405, 0.7978846
    %v414 = vtanh.pop %v406
    %v415 = vtanh.pop %v407
    %v416 = vtanh.pop %v408
    %v417 = vtanh.pop %v409
    %v418 = vtanh.pop %v410
    %v419 = vtanh.pop %v411
    %v420 = vtanh.pop %v412
    %v421 = vtanh.pop %v413
    %v422 = vadd.f32 %v414, 1.0
    %v423 = vadd.f32 %v415, 1.0
    %v424 = vadd.f32 %v416, 1.0
    %v425 = vadd.f32 %v417, 1.0
    %v426 = vadd.f32 %v418, 1.0
    %v427 = vadd.f32 %v419, 1.0
    %v428 = vadd.f32 %v420, 1.0
    %v429 = vadd.f32 %v421, 1.0
    %v430 = vmul.f32 %v366, %v422
    %v431 = vmul.f32 %v367, %v423
    %v432 = vmul.f32 %v368, %v424
    %v433 = vmul.f32 %v369, %v425
    %v434 = vmul.f32 %v370, %v426
    %v435 = vmul.f32 %v371, %v427
    %v436 = vmul.f32 %v372, %v428
    %v437 = vmul.f32 %v373, %v429
    %v438 = vpack.c.bf16 %v434, %v430
    %v439 = vpack.c.bf16 %v435, %v431
    %v440 = vpack.c.bf16 %v436, %v432
    %v441 = vpack.c.bf16 %v437, %v433
    %v442 = vld [vmem:[#allocation7] sm:$0xf]
    %v443 = vld [vmem:[#allocation7 + $0x4] sm:$0xf]
    %v444 = vld [vmem:[#allocation7 + $0x8] sm:$0xf]
    %v445 = vld [vmem:[#allocation7 + $0xc] sm:$0xf]
    %v446 = vld [vmem:[#allocation7 + $0x10] sm:$0xf]
    %v447 = vld [vmem:[#allocation7 + $0x14] sm:$0xf]
    %v448 = vld [vmem:[#allocation7 + $0x18] sm:$0xf]
    %v449 = vld [vmem:[#allocation7 + $0x1c] sm:$0xf]
    %v450 = vld [vmem:[#allocation7 + $0x20] sm:$0xf]
    %v451 = vld [vmem:[#allocation7 + $0x24] sm:$0xf]
    %v452 = vld [vmem:[#allocation7 + $0x28] sm:$0xf]
    %v453 = vld [vmem:[#allocation7 + $0x2c] sm:$0xf]
    %v454 = vld [vmem:[#allocation7 + $0x30] sm:$0xf]
    %v455 = vld [vmem:[#allocation7 + $0x34] sm:$0xf]
    %v456 = vld [vmem:[#allocation7 + $0x38] sm:$0xf]
    %v457 = vld [vmem:[#allocation7 + $0x3c] sm:$0xf]
    %v458 = vld [vmem:[#allocation7 + $0x40] sm:$0xf]
    %v459 = vld [vmem:[#allocation7 + $0x44] sm:$0xf]
    %v460 = vld [vmem:[#allocation7 + $0x48] sm:$0xf]
    %v461 = vld [vmem:[#allocation7 + $0x4c] sm:$0xf]
    %v462 = vld [vmem:[#allocation7 + $0x50] sm:$0xf]
    %v463 = vld [vmem:[#allocation7 + $0x54] sm:$0xf]
    %v464 = vld [vmem:[#allocation7 + $0x58] sm:$0xf]
    %v465 = vld [vmem:[#allocation7 + $0x5c] sm:$0xf]
    %v466 = vld [vmem:[#allocation7 + $0x60] sm:$0xf]
    %v467 = vld [vmem:[#allocation7 + $0x64] sm:$0xf]
    %v468 = vld [vmem:[#allocation7 + $0x68] sm:$0xf]
    %v469 = vld [vmem:[#allocation7 + $0x6c] sm:$0xf]
    %v470 = vld [vmem:[#allocation7 + $0x70] sm:$0xf]
    %v471 = vld [vmem:[#allocation7 + $0x74] sm:$0xf]
    %v472 = vld [vmem:[#allocation7 + $0x78] sm:$0xf]
    %v473 = vld [vmem:[#allocation7 + $0x7c] sm:$0xf]
    %v474 = vld [vmem:[#allocation7 + $0x80] sm:$0xf]
    %v475 = vld [vmem:[#allocation7 + $0x84] sm:$0xf]
    %v476 = vld [vmem:[#allocation7 + $0x88] sm:$0xf]
    %v477 = vld [vmem:[#allocation7 + $0x8c] sm:$0xf]
    %v478 = vld [vmem:[#allocation7 + $0x90] sm:$0xf]
    %v479 = vld [vmem:[#allocation7 + $0x94] sm:$0xf]
    %v480 = vld [vmem:[#allocation7 + $0x98] sm:$0xf]
    %v481 = vld [vmem:[#allocation7 + $0x9c] sm:$0xf]
    %v482 = vld [vmem:[#allocation7 + $0xa0] sm:$0xf]
    %v483 = vld [vmem:[#allocation7 + $0xa4] sm:$0xf]
    %v484 = vld [vmem:[#allocation7 + $0xa8] sm:$0xf]
    %v485 = vld [vmem:[#allocation7 + $0xac] sm:$0xf]
    %v486 = vld [vmem:[#allocation7 + $0xb0] sm:$0xf]
    %v487 = vld [vmem:[#allocation7 + $0xb4] sm:$0xf]
    %v488 = vld [vmem:[#allocation7 + $0xb8] sm:$0xf]
    %v489 = vld [vmem:[#allocation7 + $0xbc] sm:$0xf]
    %v490 = vld [vmem:[#allocation7 + $0xc0] sm:$0xf]
    %v491 = vld [vmem:[#allocation7 + $0xc4] sm:$0xf]
    %v492 = vld [vmem:[#allocation7 + $0xc8] sm:$0xf]
    %v493 = vld [vmem:[#allocation7 + $0xcc] sm:$0xf]
    %v494 = vld [vmem:[#allocation7 + $0xd0] sm:$0xf]
    %v495 = vld [vmem:[#allocation7 + $0xd4] sm:$0xf]
    %v496 = vld [vmem:[#allocation7 + $0xd8] sm:$0xf]
    %v497 = vld [vmem:[#allocation7 + $0xdc] sm:$0xf]
    %v498 = vld [vmem:[#allocation7 + $0xe0] sm:$0xf]
    %v499 = vld [vmem:[#allocation7 + $0xe4] sm:$0xf]
    %v500 = vld [vmem:[#allocation7 + $0xe8] sm:$0xf]
    %v501 = vld [vmem:[#allocation7 + $0xec] sm:$0xf]
    %v502 = vld [vmem:[#allocation7 + $0xf0] sm:$0xf]
    %v503 = vld [vmem:[#allocation7 + $0xf4] sm:$0xf]
    %v504 = vld [vmem:[#allocation7 + $0xf8] sm:$0xf]
    %v505 = vld [vmem:[#allocation7 + $0xfc] sm:$0xf]
    %v506 = vld [vmem:[%s4] sm:$0x1]
    %v508 = vlaneseq
    %v509 = vshrl.u32 %v508, 7
    %v510 = vsub.s32 0, %v509
    %v511 = vrot.slane %v506, %v510
    %v577 = vunpack.c.l.b16 %v442
    %v578 = vunpack.c.l.b16 %v443
    %v579 = vunpack.c.l.b16 %v444
    %v580 = vunpack.c.l.b16 %v445
    %v581 = vunpack.c.l.b16 %v446
    %v582 = vunpack.c.l.b16 %v447
    %v583 = vunpack.c.l.b16 %v448
    %v584 = vunpack.c.l.b16 %v449
    %v585 = vunpack.c.l.b16 %v450
    %v586 = vunpack.c.l.b16 %v451
    %v587 = vunpack.c.l.b16 %v452
    %v588 = vunpack.c.l.b16 %v453
    %v589 = vunpack.c.l.b16 %v454
    %v590 = vunpack.c.l.b16 %v455
    %v591 = vunpack.c.l.b16 %v456
    %v592 = vunpack.c.l.b16 %v457
    %v593 = vunpack.c.l.b16 %v458
    %v594 = vunpack.c.l.b16 %v459
    %v595 = vunpack.c.l.b16 %v460
    %v596 = vunpack.c.l.b16 %v461
    %v597 = vunpack.c.l.b16 %v462
    %v598 = vunpack.c.l.b16 %v463
    %v599 = vunpack.c.l.b16 %v464
    %v600 = vunpack.c.l.b16 %v465
    %v601 = vunpack.c.l.b16 %v466
    %v602 = vunpack.c.l.b16 %v467
    %v603 = vunpack.c.l.b16 %v468
    %v604 = vunpack.c.l.b16 %v469
    %v605 = vunpack.c.l.b16 %v470
    %v606 = vunpack.c.l.b16 %v471
    %v607 = vunpack.c.l.b16 %v472
    %v608 = vunpack.c.l.b16 %v473
    %v609 = vunpack.c.l.b16 %v474
    %v610 = vunpack.c.l.b16 %v475
    %v611 = vunpack.c.l.b16 %v476
    %v612 = vunpack.c.l.b16 %v477
    %v613 = vunpack.c.l.b16 %v478
    %v614 = vunpack.c.l.b16 %v479
    %v615 = vunpack.c.l.b16 %v480
    %v616 = vunpack.c.l.b16 %v481
    %v617 = vunpack.c.l.b16 %v482
    %v618 = vunpack.c.l.b16 %v483
    %v619 = vunpack.c.l.b16 %v484
    %v620 = vunpack.c.l.b16 %v485
    %v621 = vunpack.c.l.b16 %v486
    %v622 = vunpack.c.l.b16 %v487
    %v623 = vunpack.c.l.b16 %v488
    %v624 = vunpack.c.l.b16 %v489
    %v625 = vunpack.c.l.b16 %v490
    %v626 = vunpack.c.l.b16 %v491
    %v627 = vunpack.c.l.b16 %v492
    %v628 = vunpack.c.l.b16 %v493
    %v629 = vunpack.c.l.b16 %v494
    %v630 = vunpack.c.l.b16 %v495
    %v631 = vunpack.c.l.b16 %v496
    %v632 = vunpack.c.l.b16 %v497
    %v633 = vunpack.c.l.b16 %v498
    %v634 = vunpack.c.l.b16 %v499
    %v635 = vunpack.c.l.b16 %v500
    %v636 = vunpack.c.l.b16 %v501
    %v637 = vunpack.c.l.b16 %v502
    %v638 = vunpack.c.l.b16 %v503
    %v639 = vunpack.c.l.b16 %v504
    %v640 = vunpack.c.l.b16 %v505
    %v641 = vpack.c.b16 %v578, %v577
    %v642 = vpack.c.b16 %v580, %v579
    %v643 = vpack.c.b16 %v582, %v581
    %v644 = vpack.c.b16 %v584, %v583
    %v645 = vpack.c.b16 %v586, %v585
    %v646 = vpack.c.b16 %v588, %v587
    %v647 = vpack.c.b16 %v590, %v589
    %v648 = vpack.c.b16 %v592, %v591
    %v649 = vpack.c.b16 %v594, %v593
    %v650 = vpack.c.b16 %v596, %v595
    %v651 = vpack.c.b16 %v598, %v597
    %v652 = vpack.c.b16 %v600, %v599
    %v653 = vpack.c.b16 %v602, %v601
    %v654 = vpack.c.b16 %v604, %v603
    %v655 = vpack.c.b16 %v606, %v605
    %v656 = vpack.c.b16 %v608, %v607
    %v657 = vpack.c.b16 %v610, %v609
    %v658 = vpack.c.b16 %v612, %v611
    %v659 = vpack.c.b16 %v614, %v613
    %v660 = vpack.c.b16 %v616, %v615
    %v661 = vpack.c.b16 %v618, %v617
    %v662 = vpack.c.b16 %v620, %v619
    %v663 = vpack.c.b16 %v622, %v621
    %v664 = vpack.c.b16 %v624, %v623
    %v665 = vpack.c.b16 %v626, %v625
    %v666 = vpack.c.b16 %v628, %v627
    %v667 = vpack.c.b16 %v630, %v629
    %v668 = vpack.c.b16 %v632, %v631
    %v669 = vpack.c.b16 %v634, %v633
    %v670 = vpack.c.b16 %v636, %v635
    %v671 = vpack.c.b16 %v638, %v637
    %v672 = vpack.c.b16 %v640, %v639
    %705 = vmatprep.subr.bf16.mxu0 0
    %706 = vmatpush1.bf16.msra.mxu0 %v641
    %707 = vmatprep.subr.bf16.mxu0 0
    %708 = vmatpush1.bf16.msra.mxu0 %v642
    %709 = vmatprep.subr.bf16.mxu0 0
    %710 = vmatpush1.bf16.msra.mxu0 %v643
    %711 = vmatprep.subr.bf16.mxu0 0
    %712 = vmatpush1.bf16.msra.mxu0 %v644
    %713 = vmatprep.subr.bf16.mxu0 0
    %714 = vmatpush1.bf16.msra.mxu0 %v645
    %715 = vmatprep.subr.bf16.mxu0 0
    %716 = vmatpush1.bf16.msra.mxu0 %v646
    %717 = vmatprep.subr.bf16.mxu0 0
    %718 = vmatpush1.bf16.msra.mxu0 %v647
    %719 = vmatprep.subr.bf16.mxu0 0
    %720 = vmatpush1.bf16.msra.mxu0 %v648
    %721 = vmatprep.subr.bf16.mxu0 0
    %722 = vmatpush1.bf16.msra.mxu0 %v649
    %723 = vmatprep.subr.bf16.mxu0 0
    %724 = vmatpush1.bf16.msra.mxu0 %v650
    %725 = vmatprep.subr.bf16.mxu0 0
    %726 = vmatpush1.bf16.msra.mxu0 %v651
    %727 = vmatprep.subr.bf16.mxu0 0
    %728 = vmatpush1.bf16.msra.mxu0 %v652
    %729 = vmatprep.subr.bf16.mxu0 0
    %730 = vmatpush1.bf16.msra.mxu0 %v653
    %731 = vmatprep.subr.bf16.mxu0 0
    %732 = vmatpush1.bf16.msra.mxu0 %v654
    %733 = vmatprep.subr.bf16.mxu0 0
    %734 = vmatpush1.bf16.msra.mxu0 %v655
    %735 = vmatprep.subr.bf16.mxu0 0
    %736 = vmatpush1.bf16.msra.mxu0 %v656
    %737 = vmatprep.mubr.bf16.mxu0 %v439
    %738 = vmatmul.mubr.bf16.gmra.mrb[0].mxu0 %v438
    %v739 = vpop.f32.mrb[0].mxu0
    %v740 = vadd.f32 %v511, %v739
    %v741 = vpop.f32.mrb[0].mxu0
    %v742 = vpop.f32.mrb[0].mxu0
    %v743 = vadd.f32 %v511, %v742
    %v744 = vpop.f32.mrb[0].mxu0
    %745 = vdwg.mxu0
    %746 = vmatprep.subr.bf16.mxu0 0
    %747 = vmatpush1.bf16.msra.mxu0 %v657
    %748 = vmatprep.subr.bf16.mxu0 0
    %749 = vmatpush1.bf16.msra.mxu0 %v658
    %750 = vmatprep.subr.bf16.mxu0 0
    %751 = vmatpush1.bf16.msra.mxu0 %v659
    %752 = vmatprep.subr.bf16.mxu0 0
    %753 = vmatpush1.bf16.msra.mxu0 %v660
    %754 = vmatprep.subr.bf16.mxu0 0
    %755 = vmatpush1.bf16.msra.mxu0 %v661
    %756 = vmatprep.subr.bf16.mxu0 0
    %757 = vmatpush1.bf16.msra.mxu0 %v662
    %758 = vmatprep.subr.bf16.mxu0 0
    %759 = vmatpush1.bf16.msra.mxu0 %v663
    %760 = vmatprep.subr.bf16.mxu0 0
    %761 = vmatpush1.bf16.msra.mxu0 %v664
    %762 = vmatprep.subr.bf16.mxu0 0
    %763 = vmatpush1.bf16.msra.mxu0 %v665
    %764 = vmatprep.subr.bf16.mxu0 0
    %765 = vmatpush1.bf16.msra.mxu0 %v666
    %766 = vmatprep.subr.bf16.mxu0 0
    %767 = vmatpush1.bf16.msra.mxu0 %v667
    %768 = vmatprep.subr.bf16.mxu0 0
    %769 = vmatpush1.bf16.msra.mxu0 %v668
    %770 = vmatprep.subr.bf16.mxu0 0
    %771 = vmatpush1.bf16.msra.mxu0 %v669
    %772 = vmatprep.subr.bf16.mxu0 0
    %773 = vmatpush1.bf16.msra.mxu0 %v670
    %774 = vmatprep.subr.bf16.mxu0 0
    %775 = vmatpush1.bf16.msra.mxu0 %v671
    %776 = vmatprep.subr.bf16.mxu0 0
    %777 = vmatpush1.bf16.msra.mxu0 %v672
    %778 = vmatprep.mubr.bf16.mxu0 %v441
    %779 = vmatmul.mubr.bf16.gmra.mrb[0].mxu0 %v440
    %v780 = vpop.f32.mrb[0].mxu0
    %v781 = vadd.f32 %v740, %v780
    %v782 = vpop.f32.mrb[0].mxu0
    %v783 = vpop.f32.mrb[0].mxu0
    %v784 = vadd.f32 %v743, %v783
    %v785 = vpop.f32.mrb[0].mxu0
    %786 = vdwg.mxu0
    %787 = vst [vmem:[#allocation8] sm:$0xff] %v781
    %788 = vst [vmem:[#allocation8 + $0x8] sm:$0xff] %v784
    // Predicated region
    $region34: #{tpu_custom_call.1} parent=1 // pred_check
      _
    $region35: #{tpu_custom_call.1} parent=1 // pred_check_branch
      %790 = sbr.rel (0) target = $region37
    $region36: #{tpu_custom_call.1} parent=1 // pred_region
      %s792 = ssub.s32 256, 256
      %793 = vsyncadd [#allocation4], %s792
      %s794 = sshll.u32 [#allocation8], 4
      %s795 = int_to_ptr.vmem [resolvable:$true] %s794
      %800 = dma.vmem_to_hbm [thread:$0]  %s795, 256, %s5, [#allocation4], 128, 128, 8
    $region37: #{tpu_custom_call.1} parent=1 // pred_fallthru
      _
    // Predicated region
    $region38: #{tpu_custom_call.1} parent=1 // pred_check
      _
    $region39: #{tpu_custom_call.1} parent=1 // pred_check_branch
      %802 = sbr.rel (0) target = $region41
    $region40: #{tpu_custom_call.1} parent=1 // pred_region
      %803 = dma.done [#allocation4], 256
    $region41: #{tpu_custom_call.1} parent=1 // pred_fallthru
      _
    %804 = vsyncpa [#allocation3], 1
    %805 = vsyncpa [#allocation6], 1
    %806 = vsyncpa [#allocation4], 1

</llo_original>
